<compile_context>
chip_gen: v6e
topology: v6e:2x2x1
jax: 0.10.0
libtpu: 0.0.40
codegen_flags: <defaults>
</compile_context>

<pallas_src>
import math
import functools

import jax
import jax.numpy as jnp
from jax.experimental import pallas as pl
from jax.experimental.pallas import tpu as pltpu


_TARGET_BLOCK_BYTES = 3 << 20   # ~3 MiB output block (double-buffered ~6 MiB)
_MAX_LANE_CHUNK = 32768         # max lanes per output-row chunk (128 KiB per row)


def _round_up(a: int, m: int) -> int:
    return ((a + m - 1) // m) * m


def _pe2d_kernel(y_ref, x_ref, o_ref, *, reps: int):
    """o = tile(y, reps) + x  — pure broadcast-add, no transcendentals in the kernel.

    y_ref : (tH, P)  per-row y pattern, one full lane period (P % 128 == 0)
    x_ref : (1,  L)  per-column x pattern for this lane chunk
    o_ref : (tH, L)  lane-dense output block (leading batch dim squeezed out)
    """
    y = y_ref[...]
    # P is a multiple of 128 lanes, so this tile lowers to whole-vreg copies
    # (no lane-padded intermediate, no cross-lane relayout).
    row = y if reps == 1 else jnp.tile(y, (1, reps))
    o_ref[...] = row + x_ref[...]          # x broadcasts over the tH sublanes


def positional_encoding_2d(B: int, H: int, W: int, d_model: int):
    if d_model % 4 != 0:
        raise ValueError("d_model doit être divisible par 4")
    dim = d_model // 4
    half = d_model // 2
    # d_model == 4 edge case: PyTorch reference would raise ZeroDivisionError;
    # here div_term degenerates to [1.0].
    denom = dim - 1 if dim > 1 else 1

    # --- tiny separable tables: only (H + W) * d_model/2 transcendentals, once ---
    div_term = jnp.exp(
        jnp.arange(dim, dtype=jnp.float32) * (-math.log(10000.0) / denom))
    y_ang = jnp.arange(H, dtype=jnp.float32)[:, None] * div_term           # (H, dim)
    x_ang = jnp.arange(W, dtype=jnp.float32)[:, None] * div_term           # (W, dim)
    y_enc = jnp.concatenate([jnp.sin(y_ang), jnp.cos(y_ang)], axis=-1)     # (H, half)
    x_enc = jnp.concatenate([jnp.sin(x_ang), jnp.cos(x_ang)], axis=-1)     # (W, half)
    # Disjoint channel halves -> in-kernel add == channel concatenation.
    y_chan = jnp.concatenate([y_enc, jnp.zeros((H, half), jnp.float32)], axis=-1)  # (H, D)
    x_chan = jnp.concatenate([jnp.zeros((W, half), jnp.float32), x_enc], axis=-1)  # (W, D)

    Wd = W * d_model
    g = math.gcd(d_model, 128)
    period = d_model * 128 // g            # lcm(d_model, 128): lane period of the y pattern

    if Wd % 128 == 0:
        # Lane-dense path (Wd % 128 == 0  <=>  Wd % period == 0).
        n_periods = Wd // period
        k = min(n_periods, max(1, _MAX_LANE_CHUNK // period))
        while n_periods % k:               # largest divisor of n_periods <= budget
            k -= 1
        L = k * period                     # lane-chunk: multiple of 128, divides Wd exactly
        n_wc = Wd // L
        P = period
        reps = k
        Wd_out = Wd
        y_tab = jnp.tile(y_chan, (1, period // d_model))        # (H, P): one 128-lane period
        x_tab = x_chan.reshape(1, Wd)                           # (1, Wd)
    else:
        # TODO(synk): misaligned W*d_model (not a multiple of 128) — single padded lane
        # chunk with a full-width pre-tiled y table; only VMEM-safe for modest W*d_model.
        L = _round_up(Wd, 128)
        n_wc, P, reps, Wd_out = 1, L, 1, L
        y_tab = jnp.pad(jnp.tile(y_chan, (1, W)), ((0, 0), (0, L - Wd)))   # (H, L)
        x_tab = jnp.pad(x_chan.reshape(1, Wd), ((0, 0), (0, L - Wd)))      # (1, L)

    # --- H tiling: ~3 MiB output blocks (amortize per-grid-step overhead) ---
    row_bytes = L * 4
    tH = max(1, _TARGET_BLOCK_BYTES // row_bytes)
    if tH >= H:
        tH = H
    else:
        tH = min(max(8, (tH // 8) * 8), H)   # sublane dim multiple of 8 (or == H)
    n_h = -(-H // tH)

    # v7x megacore: guarantee >= 2 parallel grid steps when the shape allows it,
    # so both TensorCores contribute write bandwidth.
    if B * n_h * n_wc < 2 and H > 8:
        tH = min(_round_up(max(8, H // 2), 8), H)
        n_h = -(-H // tH)

    grid = (n_h, n_wc, B)   # B innermost: y/x block indices unchanged -> DMAs skipped

    out_flat = pl.pallas_call(
        functools.partial(_pe2d_kernel, reps=reps),
        out_shape=jax.ShapeDtypeStruct((B, H, Wd_out), jnp.float32),
        grid_spec=pltpu.PrefetchScalarGridSpec(
            num_scalar_prefetch=0,
            grid=grid,
            in_specs=[
                pl.BlockSpec((tH, P), lambda h, wc, b: (h, 0)),
                pl.BlockSpec((1, L), lambda h, wc, b: (0, wc)),
            ],
            # Leading batch dim squeezed: kernel ref is (tH, L); no in-kernel reshape.
            out_specs=pl.BlockSpec((None, tH, L), lambda h, wc, b: (b, h, wc)),
        ),
        compiler_params=pltpu.CompilerParams(
            dimension_semantics=("parallel", "parallel", "parallel"),
            vmem_limit_bytes=32 * 1024 * 1024,   # blocks ~3 MiB -> ample headroom on v5e/v6e/v7x
        ),
        cost_estimate=pl.CostEstimate(
            flops=B * H * Wd_out,
            transcendentals=0,
            bytes_accessed=B * H * Wd_out * 4 + H * P * 4 + Wd_out * 4,
        ),
    )(y_tab, x_tab)

    if Wd_out != Wd:
        out_flat = out_flat[..., :Wd]
    # (B, H, W*D) and (B, H, W, D) share the same row-major layout; reshape is free.
    return out_flat.reshape(B, H, W, d_model)


def _reference(B, H, W, d_model):
    # Pure-JAX reference reproducing the PyTorch forward.
    dim = d_model // 4
    denom = dim - 1 if dim > 1 else 1
    div_term = jnp.exp(jnp.arange(dim, dtype=jnp.float32) * (-math.log(10000.0) / denom))
    y_pos = jnp.arange(H, dtype=jnp.float32)[:, None]
    y_enc = jnp.concatenate([jnp.sin(y_pos * div_term), jnp.cos(y_pos * div_term)], axis=-1)
    x_pos = jnp.arange(W, dtype=jnp.float32)[:, None]
    x_enc = jnp.concatenate([jnp.sin(x_pos * div_term), jnp.cos(x_pos * div_term)], axis=-1)
    pe = jnp.zeros((B, H, W, d_model), jnp.float32)
    pe = pe.at[..., : d_model // 2].set(
        jnp.broadcast_to(y_enc[None, :, None, :], (B, H, W, 2 * dim)))
    pe = pe.at[..., d_model // 2:].set(
        jnp.broadcast_to(x_enc[None, None, :, :], (B, H, W, 2 * dim)))
    return pe


if __name__ == "__main__":
    # Module has no learnable parameters; forward only takes (B, H, W, device).
    B, H, W, d_model = 2, 16, 16, 32

    # Deterministic dummy "input" (unused by the math; satisfies the harness shape spec).
    key = jax.random.PRNGKey(0)
    _x = jax.random.normal(key, (B, d_model // 8, H, W), dtype=jnp.float32)  # noqa: F841

    pe = jax.block_until_ready(positional_encoding_2d(B, H, W, d_model))
    ref = _reference(B, H, W, d_model)

    assert pe.shape == (B, H, W, d_model)
    assert pe.dtype == jnp.float32
    assert jnp.allclose(pe, ref, atol=1e-5, rtol=1e-5)

    print("KERNEL_OK")
</pallas_src>

<mosaic_0001>
module attributes {stable_mosaic.version = 11 : i64} {
  func.func @_pe2d_kernel(%arg0: i32, %arg1: i32, %arg2: i32, %arg3: memref<16x128xf32, #tpu.memory_space<vmem>>, %arg4: memref<1x512xf32, #tpu.memory_space<vmem>>, %arg5: memref<1x16x512xf32, #tpu.memory_space<vmem>>) attributes {dimension_semantics = [#tpu.dimension_semantics<parallel>, #tpu.dimension_semantics<parallel>, #tpu.dimension_semantics<parallel>], iteration_bounds = array<i64: 1, 1, 2>, scalar_prefetch = 0 : i64, scratch_operands = 0 : i64, tpu.core_type = #tpu.core_type<tc>, window_params = [{transform_indices = @transform_0, window_bounds = array<i64: 16, 128>}, {transform_indices = @transform_1, window_bounds = array<i64: 1, 512>}, {transform_indices = @transform_2, window_bounds = array<i64: 1, 16, 512>}]} {
    %c0 = arith.constant 0 : index
    %c0_0 = arith.constant 0 : index
    %0 = vector.load %arg3[%c0, %c0_0] : memref<16x128xf32, #tpu.memory_space<vmem>>, vector<16x128xf32>
    %1 = tpu.concatenate %0, %0, %0, %0 in 1 : vector<16x128xf32>, vector<16x128xf32>, vector<16x128xf32>, vector<16x128xf32> -> vector<16x512xf32>
    %c0_1 = arith.constant 0 : index
    %c0_2 = arith.constant 0 : index
    %2 = vector.load %arg4[%c0_1, %c0_2] : memref<1x512xf32, #tpu.memory_space<vmem>>, vector<1x512xf32>
    %3 = vector.broadcast %2 : vector<1x512xf32> to vector<16x512xf32>
    %4 = arith.addf %1, %3 : vector<16x512xf32>
    %c0_3 = arith.constant 0 : index
    %c0_4 = arith.constant 0 : index
    %c0_5 = arith.constant 0 : index
    %5 = vector.load %arg5[%c0_3, %c0_4, %c0_5] : memref<1x16x512xf32, #tpu.memory_space<vmem>>, vector<1x16x512xf32>
    %6 = vector.shape_cast %5 : vector<1x16x512xf32> to vector<16x512xf32>
    %7 = vector.shape_cast %4 : vector<16x512xf32> to vector<1x16x512xf32>
    tpu.vector_store %arg5[%c0_3, %c0_4, %c0_5], %7 {strides = array<i32>} : memref<1x16x512xf32, #tpu.memory_space<vmem>>, vector<1x16x512xf32>,
    return
  }
  func.func @transform_0(%arg0: i32, %arg1: i32, %arg2: i32) -> (i32, i32) {
    %c0_i32 = arith.constant 0 : i32
    %c0_i32_0 = arith.constant 0 : i32
    return %arg0, %c0_i32 : i32, i32
  }
  func.func @transform_1(%arg0: i32, %arg1: i32, %arg2: i32) -> (i32, i32) {
    %c0_i32 = arith.constant 0 : i32
    %c0_i32_0 = arith.constant 0 : i32
    return %c0_i32, %arg1 : i32, i32
  }
  func.func @transform_2(%arg0: i32, %arg1: i32, %arg2: i32) -> (i32, i32, i32) {
    %c0_i32 = arith.constant 0 : i32
    return %arg2, %arg0, %arg1 : i32, i32, i32
  }
}

</mosaic_0001>

<llo_original>
// kernel: tpu_custom_call.1
$region0: #{tpu_custom_call.1}
  #allocation0 [shape = 'u32[]', space=smem, size = 0x4, offset = 0x4, fixed_abs, tag = 'smem constant byte address 0x4 - core index']
  #allocation1 [shape = 'u32[144,128]{1,0:T(1,128)}', space=vmem, size = 0x12000, scoped, tag = 'internal scratch']
  %s0 = inlined_call_operand.hbm [shape: f32[16,128], index: 0, kind: input, shape index: {}]
  %s1 = inlined_call_operand.hbm [shape: f32[1,512], index: 1, kind: input, shape index: {}]
  %s2 = inlined_call_operand.hbm [shape: f32[2,16,512], index: 2, kind: output, shape index: {}]
  %s3 = sld [smem:[#allocation0]]
  $region49: #{tpu_custom_call.1} parent=0
    _
  %s5 = ssub.s32 1, %s3
  %s6 = scalar_select 0, %s5, %s3
  $region1: #{tpu_custom_call.1} parent=0
    #allocation2 [shape = 'u8[8192]{0}', space=vmem, size = 0x2000, scoped, tag = 'input window, operand 0, single buffered']
    #allocation3 [shape = 's32[2]{0}', space=sflag, size = 0x8, scoped, tag = 'scoped memory for tpu_custom_call.1']
    #allocation4 [shape = 's32[2]{0}', space=sflag, size = 0x8, scoped, tag = 'scoped memory for tpu_custom_call.1']
    #allocation5 [shape = 'u8[2048]{0}', space=vmem, size = 0x800, scoped, tag = 'input window, operand 1, single buffered']
    #allocation6 [shape = 's32[1]{0}', space=sflag, size = 0x4, scoped, tag = 'scoped memory for tpu_custom_call.1']
    #allocation7 [shape = 'u8[65536]{0}', space=vmem, size = 0x10000, scoped, tag = 'output window, operand 0']
    %7 = vsyncpa [#allocation3], 0
    %8 = vsyncpa [#allocation6], 0
    %9 = vsyncpa [#allocation4], 0
    %s10 = scalar_lea.sflag [#allocation4], 1
    %11 = vsyncpa %s10, 0
    loop: start=0, step=1, limit=4
    $region2: #{tpu_custom_call.1} parent=1 // loop_pre_header
      _
    $region3: #{tpu_custom_call.1} parent=1 // loop_header
      %s13 = sphi 0, %s17
      %p14 = scmp.ge.s32.totalorder %s13, 4
      %s20 = sphi 0, %s39
      %s21 = sphi 0, %s35
      %s22 = sphi 0, %s31
      %s23 = sphi 0, %s20
      %s24 = sphi 0, %s21
      %s25 = sphi 0, %s22
      %s26 = sphi 0, %s23
      %s27 = sphi 0, %s24
      %s28 = sphi 0, %s25
      %s42 = sphi 0, %s44
      %s45 = sphi 0, %s42
      %s46 = sphi 0, %s45
      %s62 = sphi 0, %s46
      %s68 = sphi 0, %s70
      %s71 = sphi 0, %s68
      %s72 = sphi 0, %s71
      %s88 = sphi 0, %s72
      %s98 = sphi 0, %s100
      %s101 = sphi 0, %s98
      %s102 = sphi 0, %s101
      %s118 = sphi 0, %s102
    $region4: #{tpu_custom_call.1} parent=1 // loop_header_branch
      %16 = sbr.rel (%p14) target = $region8
    $region5: #{tpu_custom_call.1} parent=1 // loop_body
      %s18 = ssub.s32 %s13, 1
      %s19 = ssub.s32 %s13, 2
      %s29 = sadd.s32 1, %s22
      %p30 = scmp.ge.s32.totalorder %s29, 2
      %s31 = scalar_select %p30, 0, %s29
      %s32 = sadd.s32 1, %s21
      %s33 = scalar_select %p30, %s32, %s21
      %p34 = scmp.ge.s32.totalorder %s33, 1
      %s35 = scalar_select %p34, 0, %s33
      %s36 = sadd.s32 1, %s20
      %s37 = scalar_select %p34, %s36, %s20
      %p38 = scmp.ge.s32.totalorder %s37, 1
      %s39 = scalar_select %p38, 0, %s37
      %s40 = ssub.s32 %s20, %s39
      %p41 = scmp.eq.s32.totalorder %s40, 0
      %s43 = sadd.s32 %s42, 1
      %s44 = scalar_select %p41, %s42, %s43
      %p47 = pneg %p41
      %p48 = scmp.eq.s32.totalorder %s13, 1
      %p49 = por %p47, %p48
      %p50 = scmp.ne.s32.totalorder %s42, %s45
      %p51 = scmp.eq.s32.totalorder %s13, 0
      %p52 = por %p50, %p51
      %p53 = scmp.ne.s32.totalorder %s42, %s45
      %p54 = scmp.eq.s32.totalorder %s18, 1
      %p55 = por %p53, %p54
      %p56 = scmp.ne.s32.totalorder %s45, %s46
      %p57 = scmp.eq.s32.totalorder %s18, 0
      %p58 = por %p56, %p57
      %p59 = scmp.ne.s32.totalorder %s45, %s46
      %p60 = scmp.eq.s32.totalorder %s19, 1
      %p61 = por %p59, %p60
      %p63 = scmp.ne.s32.totalorder %s46, %s62
      %p64 = scmp.eq.s32.totalorder %s19, 0
      %p65 = por %p63, %p64
      %s66 = ssub.s32 %s21, %s35
      %p67 = scmp.eq.s32.totalorder %s66, 0
      %s69 = sadd.s32 %s68, 1
      %s70 = scalar_select %p67, %s68, %s69
      %p73 = pneg %p67
      %p74 = scmp.eq.s32.totalorder %s13, 1
      %p75 = por %p73, %p74
      %p76 = scmp.ne.s32.totalorder %s68, %s71
      %p77 = scmp.eq.s32.totalorder %s13, 0
      %p78 = por %p76, %p77
      %p79 = scmp.ne.s32.totalorder %s68, %s71
      %p80 = scmp.eq.s32.totalorder %s18, 1
      %p81 = por %p79, %p80
      %p82 = scmp.ne.s32.totalorder %s71, %s72
      %p83 = scmp.eq.s32.totalorder %s18, 0
      %p84 = por %p82, %p83
      %p85 = scmp.ne.s32.totalorder %s71, %s72
      %p86 = scmp.eq.s32.totalorder %s19, 1
      %p87 = por %p85, %p86
      %p89 = scmp.ne.s32.totalorder %s72, %s88
      %p90 = scmp.eq.s32.totalorder %s19, 0
      %p91 = por %p89, %p90
      %s92 = ssub.s32 %s22, %s31
      %s93 = ssub.s32 %s20, %s39
      %s94 = sor.u32 %s92, %s93
      %s95 = ssub.s32 %s21, %s35
      %s96 = sor.u32 %s94, %s95
      %p97 = scmp.eq.s32.totalorder %s96, 0
      %s99 = sadd.s32 %s98, 1
      %s100 = scalar_select %p97, %s98, %s99
      %p103 = pneg %p97
      %p104 = scmp.eq.s32.totalorder %s13, 1
      %p105 = por %p103, %p104
      %p106 = scmp.ne.s32.totalorder %s98, %s101
      %p107 = scmp.eq.s32.totalorder %s13, 0
      %p108 = por %p106, %p107
      %p109 = scmp.ne.s32.totalorder %s98, %s101
      %p110 = scmp.eq.s32.totalorder %s18, 1
      %p111 = por %p109, %p110
      %p112 = scmp.ne.s32.totalorder %s101, %s102
      %p113 = scmp.eq.s32.totalorder %s18, 0
      %p114 = por %p112, %p113
      %p115 = scmp.ne.s32.totalorder %s101, %s102
      %p116 = scmp.eq.s32.totalorder %s19, 1
      %p117 = por %p115, %p116
      %p119 = scmp.ne.s32.totalorder %s102, %s118
      %p120 = scmp.eq.s32.totalorder %s19, 0
      %p121 = por %p119, %p120
      %p122 = scmp.le.s32.totalorder 1, %s13
      %p123 = scmp.lt.s32.totalorder %s13, 3
      %p124 = pnand %p122, %p123
      %p125 = pneg %p124
      // Predicated region
      $region9: #{tpu_custom_call.1} parent=5 // pred_check
        _
      $region10: #{tpu_custom_call.1} parent=5 // pred_check_branch
        %127 = sbr.rel (%p124) target = $region12
      $region11: #{tpu_custom_call.1} parent=5 // pred_region
        %s128 = ssub.s32 %s13, 1
        // Predicated region
        $region13: #{tpu_custom_call.1} parent=11 // pred_check
          %p129 = pneg %p58
        $region14: #{tpu_custom_call.1} parent=11 // pred_check_branch
          %131 = sbr.rel (%p129) target = $region16
        $region15: #{tpu_custom_call.1} parent=11 // pred_region
          %s132 = smul.u32 2, %s23
          %s134 = ssub.s32 256, 256
          %135 = vsyncadd [#allocation3], %s134
          %s136 = smul.addr %s132, 128
          %s137 = scalar_lea.hbm %s0, %s136
          %s138 = sshll.u32 [#allocation2], 4
          %s139 = int_to_ptr.vmem [resolvable:$true] %s138
          %144 = dma.hbm_to_vmem [thread:$0]  %s137, 256, %s139, [#allocation3], 128, 128, 8
        $region16: #{tpu_custom_call.1} parent=11 // pred_fallthru
          _
        // Predicated region
        $region17: #{tpu_custom_call.1} parent=11 // pred_check
          %p145 = pneg %p84
        $region18: #{tpu_custom_call.1} parent=11 // pred_check_branch
          %147 = sbr.rel (%p145) target = $region20
        $region19: #{tpu_custom_call.1} parent=11 // pred_region
          %s148 = smul.u32 4, %s24
          %s150 = ssub.s32 64, 64
          %151 = vsyncadd [#allocation6], %s150
          %s152 = smul.addr %s148, 16
          %s153 = scalar_lea.hbm %s1, %s152
          %s155 = sshll.u32 [#allocation5], 4
          %s156 = int_to_ptr.vmem [resolvable:$true] %s155
          %158 = dma.hbm_to_vmem [thread:$0]  %s153, 64, %s156, [#allocation6]
        $region20: #{tpu_custom_call.1} parent=11 // pred_fallthru
          _
      $region12: #{tpu_custom_call.1} parent=5 // pred_fallthru
        _
      %p159 = scmp.lt.s32.totalorder %s13, 2
      // Predicated region
      $region21: #{tpu_custom_call.1} parent=5 // pred_check
        %p160 = pneg %p159
      $region22: #{tpu_custom_call.1} parent=5 // pred_check_branch
        %162 = sbr.rel (%p160) target = $region24
      $region23: #{tpu_custom_call.1} parent=5 // pred_region
        _
      $region24: #{tpu_custom_call.1} parent=5 // pred_fallthru
        _
      %p163 = scmp.le.s32.totalorder 1, %s13
      %p164 = scmp.lt.s32.totalorder %s13, 3
      %p165 = pnand %p163, %p164
      %p166 = pneg %p165
      // Predicated region
      $region25: #{tpu_custom_call.1} parent=5 // pred_check
        _
      $region26: #{tpu_custom_call.1} parent=5 // pred_check_branch
        %168 = sbr.rel (%p165) target = $region28
      $region27: #{tpu_custom_call.1} parent=5 // pred_region
        %s169 = ssub.s32 %s13, 1
        // Predicated region
        $region29: #{tpu_custom_call.1} parent=27 // pred_check
          %p170 = pneg %p58
        $region30: #{tpu_custom_call.1} parent=27 // pred_check_branch
          %172 = sbr.rel (%p170) target = $region32
        $region31: #{tpu_custom_call.1} parent=27 // pred_region
          %173 = dma.done [#allocation3], 256
        $region32: #{tpu_custom_call.1} parent=27 // pred_fallthru
          _
        // Predicated region
        $region33: #{tpu_custom_call.1} parent=27 // pred_check
          %p174 = pneg %p84
        $region34: #{tpu_custom_call.1} parent=27 // pred_check_branch
          %176 = sbr.rel (%p174) target = $region36
        $region35: #{tpu_custom_call.1} parent=27 // pred_region
          %177 = dma.done [#allocation6], 64
        $region36: #{tpu_custom_call.1} parent=27 // pred_fallthru
          _
        %p178 = pneg %p58
        %p179 = pneg %p55
        %p180 = pneg %p84
        %p181 = pneg %p81
        %p182 = pneg %p114
        %p183 = pneg %p111
        %s184 = sand.u32 %s101, 1
        %s185 = scalar_lea.sflag [#allocation4], %s184
        %s186 = sand.u32 %s101, 1
        %s187 = smul.addr %s186, 64
        %s188 = scalar_lea.vmem [#allocation7], %s187
        %s189 = smul.u32 2, %s23
        %s190 = smul.u32 4, %s24
        %s191 = smul.u32 2, %s23
        %s192 = smul.u32 4, %s24
        %v193 = vld [vmem:[#allocation2] sm:$0xff]
        %v194 = vld [vmem:[#allocation2 + $0x8] sm:$0xff]
        %v195 = vld [vmem:[#allocation5] sm:$0xf]
        %v197 = vlaneseq
        %v198 = vshrl.u32 %v197, 7
        %v199 = vsub.s32 0, %v198
        %v200 = vrot.slane %v195, %v199
        %v201 = vlaneseq
        %v202 = vshrl.u32 %v201, 7
        %v203 = vsub.s32 1, %v202
        %v204 = vrot.slane %v195, %v203
        %v205 = vlaneseq
        %v206 = vshrl.u32 %v205, 7
        %v207 = vsub.s32 2, %v206
        %v208 = vrot.slane %v195, %v207
        %v209 = vlaneseq
        %v210 = vshrl.u32 %v209, 7
        %v211 = vsub.s32 3, %v210
        %v212 = vrot.slane %v195, %v211
        %v217 = vadd.f32 %v193, %v200
        %v218 = vadd.f32 %v193, %v204
        %v219 = vadd.f32 %v193, %v208
        %v220 = vadd.f32 %v193, %v212
        %v221 = vadd.f32 %v194, %v200
        %v222 = vadd.f32 %v194, %v204
        %v223 = vadd.f32 %v194, %v208
        %v224 = vadd.f32 %v194, %v212
        %225 = vst [vmem:[%s188] sm:$0xff] %v217
        %226 = vst [vmem:[%s188 + $0x8] sm:$0xff] %v218
        %227 = vst [vmem:[%s188 + $0x10] sm:$0xff] %v219
        %228 = vst [vmem:[%s188 + $0x18] sm:$0xff] %v220
        %229 = vst [vmem:[%s188 + $0x20] sm:$0xff] %v221
        %230 = vst [vmem:[%s188 + $0x28] sm:$0xff] %v222
        %231 = vst [vmem:[%s188 + $0x30] sm:$0xff] %v223
        %232 = vst [vmem:[%s188 + $0x38] sm:$0xff] %v224
        %s233 = sand.u32 %s101, 1
        %s234 = scalar_lea.sflag [#allocation4], %s233
        %s235 = sand.u32 %s101, 1
        %s236 = smul.addr %s235, 64
        %s237 = scalar_lea.vmem [#allocation7], %s236
        // Predicated region
        $region37: #{tpu_custom_call.1} parent=27 // pred_check
          %p238 = pneg %p111
        $region38: #{tpu_custom_call.1} parent=27 // pred_check_branch
          %240 = sbr.rel (%p238) target = $region40
        $region39: #{tpu_custom_call.1} parent=27 // pred_region
          %s241 = smul.u32 2, %s23
          %s242 = smul.u32 4, %s24
          %s244 = ssub.s32 1024, 1024
          %245 = vsyncadd %s234, %s244
          %s246 = smul.addr %s241, 4
          %s247 = sadd.s32 %s242, %s246
          %s248 = smul.addr %s25, 8
          %s249 = sadd.s32 %s247, %s248
          %s250 = smul.addr %s249, 128
          %s251 = scalar_lea.hbm %s2, %s250
          %s252 = sshll.u32 %s237, 4
          %s253 = int_to_ptr.vmem [resolvable:$true] %s252
          %258 = dma.vmem_to_hbm [thread:$0]  %s253, 1024, %s251, %s234, 512, 512, 32
        $region40: #{tpu_custom_call.1} parent=27 // pred_fallthru
          _
      $region28: #{tpu_custom_call.1} parent=5 // pred_fallthru
        _
      %p259 = scmp.le.s32.totalorder 2, %s13
      // Predicated region
      $region41: #{tpu_custom_call.1} parent=5 // pred_check
        %p260 = pneg %p259
      $region42: #{tpu_custom_call.1} parent=5 // pred_check_branch
        %262 = sbr.rel (%p260) target = $region44
      $region43: #{tpu_custom_call.1} parent=5 // pred_region
        %s263 = ssub.s32 %s13, 2
        // Predicated region
        $region45: #{tpu_custom_call.1} parent=43 // pred_check
          %p264 = pneg %p117
        $region46: #{tpu_custom_call.1} parent=43 // pred_check_branch
          %266 = sbr.rel (%p264) target = $region48
        $region47: #{tpu_custom_call.1} parent=43 // pred_region
          %s267 = sand.u32 %s102, 1
          %s268 = scalar_lea.sflag [#allocation4], %s267
          %s269 = sand.u32 %s102, 1
          %s270 = smul.addr %s269, 64
          %s271 = scalar_lea.vmem [#allocation7], %s270
          %272 = dma.done %s268, 1024
        $region48: #{tpu_custom_call.1} parent=43 // pred_fallthru
          _
      $region44: #{tpu_custom_call.1} parent=5 // pred_fallthru
        _
    $region6: #{tpu_custom_call.1} parent=1 // loop_footer
      %s17 = sadd.s32 1, %s13
    $region7: #{tpu_custom_call.1} parent=1 // loop_footer_branch
      %12 = sbr.rel target = $region3
    $region8: #{tpu_custom_call.1} parent=1 // loop_exit
      _
    %273 = vsyncpa [#allocation3], 1
    %s274 = scalar_lea.sflag [#allocation3], 1
    %275 = vsyncpa %s274, 1
    %276 = vsyncpa [#allocation6], 1
    %277 = vsyncpa [#allocation4], 1
    %s278 = scalar_lea.sflag [#allocation4], 1
    %279 = vsyncpa %s278, 1

</llo_original>
